<compile_context>
chip_gen: v6e
topology: v6e:2x2x1
jax: 0.10.0
libtpu: 0.0.40
codegen_flags: <defaults>
</compile_context>

<pallas_src>
import jax
import jax.numpy as jnp
from jax.experimental import pallas as pl
from jax.experimental.pallas import tpu as pltpu


def _round_up(x, m):
    return (x + m - 1) // m * m


def densenet_bw_kernel(x_ref, w1_ref, b1_ref, w2_ref, b2_ref, o_ref):
    # x_ref: (TB, dim_in) native dtype; weights bf16; biases f32.
    # Cast x to bf16 in-kernel (cheap VPU cast, hidden under the DMA pipeline).
    x = x_ref[...].astype(jnp.bfloat16)

    # Linear(dim_in, 256) on the MXU, f32 accumulation + f32 bias.
    h1 = jnp.dot(x, w1_ref[...], preferred_element_type=jnp.float32) + b1_ref[...]

    # LeakyReLU(negative_slope=0.01) in bf16: keeps the h1 tile half-sized
    # between the two matmuls (less VMEM spill / vreg pressure at large TB).
    h1 = h1.astype(jnp.bfloat16)
    h1 = jnp.where(h1 > 0, h1, 0.01 * h1)

    # Linear(256, 128) on the MXU, f32 accumulation + f32 bias.
    h2 = jnp.dot(h1, w2_ref[...], preferred_element_type=jnp.float32) + b2_ref[...]

    # Softplus (PyTorch defaults: beta=1, threshold=20). log1p keeps precision
    # for strongly negative h2. Softplus >= 0, so the trailing ReLU is a no-op.
    sp = jnp.where(h2 > 20.0, h2, jnp.log1p(jnp.exp(jnp.minimum(h2, 20.0))))
    o_ref[...] = sp.astype(o_ref.dtype)


def densenet_bw_forward(x, params, *, block_rows=1024, out_dtype=jnp.float32):
    """x: [B, dim_in]. params: dict with w1,b1,w2,b2 (weights as [in, out])."""
    B, dim_in = x.shape
    hid = params["w1"].shape[1]      # 256
    out_dim = params["w2"].shape[1]  # 128

    # Batch tile: multiple of 16 (bf16 sublane packing), and small enough that
    # the grid has >=2 steps when B permits (two TensorCores on v7x), capped at
    # block_rows to amortize per-step pipeline overhead on large B.
    TB = min(block_rows, _round_up(max(-(-B // 2), 1), 16))
    grid_steps = -(-B // TB)  # ceil-div; last block is ragged and write-masked

    w1 = params["w1"].astype(jnp.bfloat16)
    w2 = params["w2"].astype(jnp.bfloat16)
    b1 = params["b1"].reshape(1, -1).astype(jnp.float32)
    b2 = params["b2"].reshape(1, -1).astype(jnp.float32)

    # Explicit VMEM budget: double-buffered x/out tiles + resident weights/biases
    # (+ h1 scratch) with headroom, so we never hit the v5e 16 MiB scoped default
    # or v7x's 64 MiB physical ceiling by surprise.
    x_tile_b = TB * dim_in * x.dtype.itemsize
    out_tile_b = TB * out_dim * jnp.dtype(out_dtype).itemsize
    h1_tile_b = TB * hid * 2  # bf16 intermediate
    weights_b = (dim_in * hid + hid * out_dim) * 2 + (hid + out_dim) * 4
    needed = 2 * (x_tile_b + out_tile_b) + 2 * weights_b + 2 * h1_tile_b
    vmem_limit = int(min(100 << 20, max(16 << 20, needed + (4 << 20))))

    Bp = grid_steps * TB
    flops = 2 * Bp * (dim_in * hid + hid * out_dim)
    transcendentals = 2 * Bp * out_dim  # exp + log1p in softplus
    bytes_accessed = (B * dim_in * x.dtype.itemsize
                      + weights_b
                      + B * out_dim * jnp.dtype(out_dtype).itemsize)

    out = pl.pallas_call(
        densenet_bw_kernel,
        out_shape=jax.ShapeDtypeStruct((B, out_dim), out_dtype),
        grid=(grid_steps,),
        in_specs=[
            pl.BlockSpec((TB, dim_in), lambda i: (i, 0)),    # x: tiled over batch
            pl.BlockSpec((dim_in, hid), lambda i: (0, 0)),   # w1: resident
            pl.BlockSpec((1, hid), lambda i: (0, 0)),        # b1: resident
            pl.BlockSpec((hid, out_dim), lambda i: (0, 0)),  # w2: resident
            pl.BlockSpec((1, out_dim), lambda i: (0, 0)),    # b2: resident
        ],
        out_specs=pl.BlockSpec((TB, out_dim), lambda i: (i, 0)),
        compiler_params=pltpu.CompilerParams(
            dimension_semantics=("parallel",),
            vmem_limit_bytes=vmem_limit),
        cost_estimate=pl.CostEstimate(
            flops=flops,
            transcendentals=transcendentals,
            bytes_accessed=bytes_accessed),
    )(x, w1, b1, w2, b2)

    return out


def init_params(key, dim_in):
    """Deterministic init mimicking nn.Linear's uniform(-1/sqrt(fan_in), 1/sqrt(fan_in))."""
    dims = [(dim_in, 256), (256, 128)]
    params = {}
    for idx, (fan_in, fan_out) in enumerate(dims, start=1):
        key, kw, kb = jax.random.split(key, 3)
        bound = 1.0 / (fan_in ** 0.5)
        params[f"w{idx}"] = jax.random.uniform(
            kw, (fan_in, fan_out), jnp.float32, -bound, bound)
        params[f"b{idx}"] = jax.random.uniform(
            kb, (1, fan_out), jnp.float32, -bound, bound)
    return params


if __name__ == "__main__":
    key = jax.random.PRNGKey(0)
    key, kx = jax.random.split(key)

    # Small demo shapes; B=36 exercises 2 grid steps + a ragged (masked) last block.
    B, dim_in = 36, 128
    x = jax.random.normal(kx, (B, dim_in), jnp.float32)
    params = init_params(key, dim_in)

    feats = densenet_bw_forward(x, params)
    jax.block_until_ready(feats)

    # Pure-JAX reference with the same bf16 rounding of matmul operands.
    xr = x.astype(jnp.bfloat16).astype(jnp.float32)
    w1r = params["w1"].astype(jnp.bfloat16).astype(jnp.float32)
    w2r = params["w2"].astype(jnp.bfloat16).astype(jnp.float32)
    h1 = xr @ w1r + params["b1"]
    h1 = h1.astype(jnp.bfloat16).astype(jnp.float32)
    h1 = jnp.where(h1 > 0.0, h1, 0.01 * h1)
    h1 = h1.astype(jnp.bfloat16).astype(jnp.float32)
    h2 = h1 @ w2r + params["b2"]
    sp = jnp.where(h2 > 20.0, h2, jnp.log1p(jnp.exp(jnp.minimum(h2, 20.0))))
    ref = jnp.maximum(sp, 0.0)

    assert feats.shape == (B, 128)
    assert jnp.allclose(feats.astype(jnp.float32), ref, atol=2e-2, rtol=2e-2)

    print("KERNEL_OK")
</pallas_src>

<mosaic_0001>
module attributes {stable_mosaic.version = 11 : i64} {
  func.func @densenet_bw_kernel(%arg0: i32, %arg1: memref<32x128xf32, #tpu.memory_space<vmem>>, %arg2: memref<128x256xbf16, #tpu.memory_space<vmem>>, %arg3: memref<1x256xf32, #tpu.memory_space<vmem>>, %arg4: memref<256x128xbf16, #tpu.memory_space<vmem>>, %arg5: memref<1x128xf32, #tpu.memory_space<vmem>>, %arg6: memref<32x128xf32, #tpu.memory_space<vmem>>) attributes {dimension_semantics = [#tpu.dimension_semantics<parallel>], iteration_bounds = array<i64: 2>, scalar_prefetch = 0 : i64, scratch_operands = 0 : i64, tpu.core_type = #tpu.core_type<tc>, window_params = [{transform_indices = @transform_0, window_bounds = array<i64: 32, 128>}, {pipeline_mode = #tpu.pipeline_mode<synchronous>, transform_indices = @transform_1, window_bounds = array<i64: 128, 256>}, {pipeline_mode = #tpu.pipeline_mode<synchronous>, transform_indices = @transform_2, window_bounds = array<i64: 1, 256>}, {pipeline_mode = #tpu.pipeline_mode<synchronous>, transform_indices = @transform_3, window_bounds = array<i64: 256, 128>}, {pipeline_mode = #tpu.pipeline_mode<synchronous>, transform_indices = @transform_4, window_bounds = array<i64: 1, 128>}, {transform_indices = @transform_5, window_bounds = array<i64: 32, 128>}]} {
    %c0 = arith.constant 0 : index
    %c0_0 = arith.constant 0 : index
    %0 = vector.load %arg1[%c0, %c0_0] : memref<32x128xf32, #tpu.memory_space<vmem>>, vector<32x128xf32>
    %1 = arith.truncf %0 : vector<32x128xf32> to vector<32x128xbf16>
    %c0_1 = arith.constant 0 : index
    %c0_2 = arith.constant 0 : index
    %2 = vector.load %arg2[%c0_1, %c0_2] : memref<128x256xbf16, #tpu.memory_space<vmem>>, vector<128x256xbf16>
    %cst = arith.constant dense<0.000000e+00> : vector<32x256xf32>
    %3 = tpu.matmul %1, %2, %cst {dimension_numbers = #tpu.dot_dimension_numbers<[1], [0], [0], [1], [0, 0, 1, 1], [], []>} : vector<32x128xbf16>, vector<128x256xbf16>, vector<32x256xf32> -> vector<32x256xf32>
    %c0_3 = arith.constant 0 : index
    %c0_4 = arith.constant 0 : index
    %4 = vector.load %arg3[%c0_3, %c0_4] : memref<1x256xf32, #tpu.memory_space<vmem>>, vector<1x256xf32>
    %5 = vector.broadcast %4 : vector<1x256xf32> to vector<32x256xf32>
    %6 = arith.addf %3, %5 : vector<32x256xf32>
    %7 = arith.truncf %6 : vector<32x256xf32> to vector<32x256xbf16>
    %cst_5 = arith.constant 0.000000e+00 : bf16
    %8 = vector.broadcast %cst_5 : bf16 to vector<32x256xbf16>
    %9 = arith.cmpf ogt, %7, %8 : vector<32x256xbf16>
    %cst_6 = arith.constant 1.000980e-02 : bf16
    %10 = vector.broadcast %cst_6 : bf16 to vector<32x256xbf16>
    %11 = arith.mulf %10, %7 : vector<32x256xbf16>
    %12 = arith.select %9, %7, %11 : vector<32x256xi1>, vector<32x256xbf16>
    %c0_7 = arith.constant 0 : index
    %c0_8 = arith.constant 0 : index
    %13 = vector.load %arg4[%c0_7, %c0_8] : memref<256x128xbf16, #tpu.memory_space<vmem>>, vector<256x128xbf16>
    %cst_9 = arith.constant dense<0.000000e+00> : vector<32x128xf32>
    %14 = tpu.matmul %12, %13, %cst_9 {dimension_numbers = #tpu.dot_dimension_numbers<[1], [0], [0], [1], [0, 0, 1, 1], [], []>} : vector<32x256xbf16>, vector<256x128xbf16>, vector<32x128xf32> -> vector<32x128xf32>
    %c0_10 = arith.constant 0 : index
    %c0_11 = arith.constant 0 : index
    %15 = vector.load %arg5[%c0_10, %c0_11] : memref<1x128xf32, #tpu.memory_space<vmem>>, vector<1x128xf32>
    %16 = vector.broadcast %15 : vector<1x128xf32> to vector<32x128xf32>
    %17 = arith.addf %14, %16 : vector<32x128xf32>
    %cst_12 = arith.constant 2.000000e+01 : f32
    %18 = vector.broadcast %cst_12 : f32 to vector<32x128xf32>
    %19 = arith.cmpf ogt, %17, %18 : vector<32x128xf32>
    %cst_13 = arith.constant 2.000000e+01 : f32
    %20 = vector.broadcast %cst_13 : f32 to vector<32x128xf32>
    %21 = arith.minimumf %17, %20 : vector<32x128xf32>
    %22 = math.exp %21 : vector<32x128xf32>
    %23 = math.log1p %22 : vector<32x128xf32>
    %24 = arith.select %19, %17, %23 : vector<32x128xi1>, vector<32x128xf32>
    %c0_14 = arith.constant 0 : index
    %c0_15 = arith.constant 0 : index
    %25 = vector.load %arg6[%c0_14, %c0_15] : memref<32x128xf32, #tpu.memory_space<vmem>>, vector<32x128xf32>
    tpu.vector_store %arg6[%c0_14, %c0_15], %24 {strides = array<i32>} : memref<32x128xf32, #tpu.memory_space<vmem>>, vector<32x128xf32>,
    return
  }
  func.func @transform_0(%arg0: i32) -> (i32, i32) {
    %c0_i32 = arith.constant 0 : i32
    %c0_i32_0 = arith.constant 0 : i32
    return %arg0, %c0_i32 : i32, i32
  }
  func.func @transform_1(%arg0: i32) -> (i32, i32) {
    %c0_i32 = arith.constant 0 : i32
    %c0_i32_0 = arith.constant 0 : i32
    %c0_i32_1 = arith.constant 0 : i32
    return %c0_i32, %c0_i32_0 : i32, i32
  }
  func.func @transform_2(%arg0: i32) -> (i32, i32) {
    %c0_i32 = arith.constant 0 : i32
    %c0_i32_0 = arith.constant 0 : i32
    %c0_i32_1 = arith.constant 0 : i32
    return %c0_i32, %c0_i32_0 : i32, i32
  }
  func.func @transform_3(%arg0: i32) -> (i32, i32) {
    %c0_i32 = arith.constant 0 : i32
    %c0_i32_0 = arith.constant 0 : i32
    %c0_i32_1 = arith.constant 0 : i32
    return %c0_i32, %c0_i32_0 : i32, i32
  }
  func.func @transform_4(%arg0: i32) -> (i32, i32) {
    %c0_i32 = arith.constant 0 : i32
    %c0_i32_0 = arith.constant 0 : i32
    %c0_i32_1 = arith.constant 0 : i32
    return %c0_i32, %c0_i32_0 : i32, i32
  }
  func.func @transform_5(%arg0: i32) -> (i32, i32) {
    %c0_i32 = arith.constant 0 : i32
    %c0_i32_0 = arith.constant 0 : i32
    return %arg0, %c0_i32 : i32, i32
  }
}

</mosaic_0001>

<llo_original>
// kernel: tpu_custom_call.1
$region0: #{tpu_custom_call.1}
  #allocation0 [shape = 'u32[]', space=smem, size = 0x4, offset = 0x4, fixed_abs, tag = 'smem constant byte address 0x4 - core index']
  #allocation1 [shape = 'u32[144,128]{1,0:T(1,128)}', space=vmem, size = 0x12000, scoped, tag = 'internal scratch']
  %s0 = inlined_call_operand.hbm [shape: f32[36,128], index: 0, kind: input, shape index: {}]
  %s1 = inlined_call_operand.hbm [shape: bf16[128,256], index: 1, kind: input, shape index: {}]
  %s2 = inlined_call_operand.vmem [shape: f32[1,256], index: 2, kind: input, shape index: {}]
  %s3 = inlined_call_operand.hbm [shape: bf16[256,128], index: 3, kind: input, shape index: {}]
  %s4 = inlined_call_operand.vmem [shape: f32[1,128], index: 4, kind: input, shape index: {}]
  %s5 = inlined_call_operand.hbm [shape: f32[36,128], index: 5, kind: output, shape index: {}]
  %s6 = sld [smem:[#allocation0]]
  $region65: #{tpu_custom_call.1} parent=0
    _
  %s8 = ssub.s32 1, %s6
  %s9 = scalar_select 0, %s8, %s6
  $region1: #{tpu_custom_call.1} parent=0
    #allocation2 [shape = 'u8[32768]{0}', space=vmem, size = 0x8000, scoped, tag = 'input window, operand 0']
    #allocation3 [shape = 's32[2]{0}', space=sflag, size = 0x8, scoped, tag = 'scoped memory for tpu_custom_call.1']
    #allocation4 [shape = 's32[2]{0}', space=sflag, size = 0x8, scoped, tag = 'scoped memory for tpu_custom_call.1']
    #allocation5 [shape = 'u8[65536]{0}', space=vmem, size = 0x10000, scoped, tag = 'input window, operand 1, single buffered']
    #allocation6 [shape = 's32[1]{0}', space=sflag, size = 0x4, scoped, tag = 'scoped memory for tpu_custom_call.1']
    #allocation7 [shape = 'u8[65536]{0}', space=vmem, size = 0x10000, scoped, tag = 'input window, operand 3, single buffered']
    #allocation8 [shape = 'u8[32768]{0}', space=vmem, size = 0x8000, scoped, tag = 'output window, operand 0']
    %10 = vsyncpa [#allocation3], 0
    %s11 = scalar_lea.sflag [#allocation3], 1
    %12 = vsyncpa %s11, 0
    %13 = vsyncpa [#allocation6], 0
    %14 = vsyncpa [#allocation4], 0
    %s15 = scalar_lea.sflag [#allocation4], 1
    %16 = vsyncpa %s15, 0
    loop: start=0, step=1, limit=4
    $region2: #{tpu_custom_call.1} parent=1 // loop_pre_header
      _
    $region3: #{tpu_custom_call.1} parent=1 // loop_header
      %s18 = sphi 0, %s22
      %p19 = scmp.ge.s32.totalorder %s18, 4
      %s28 = sphi 0, %s30
      %s31 = sphi 0, %s28
      %s32 = sphi 0, %s31
      %s48 = sphi 0, %s32
      %s52 = sphi 0, %s52
      %s54 = sphi 0, %s52
      %s55 = sphi 0, %s54
      %s69 = sphi 0, %s55
      %s73 = sphi 0, %s73
      %s75 = sphi 0, %s73
      %s76 = sphi 0, %s75
      %s90 = sphi 0, %s76
      %s94 = sphi 0, %s94
      %s96 = sphi 0, %s94
      %s97 = sphi 0, %s96
      %s111 = sphi 0, %s97
      %s115 = sphi 0, %s115
      %s117 = sphi 0, %s115
      %s118 = sphi 0, %s117
      %s132 = sphi 0, %s118
      %s138 = sphi 0, %s140
      %s141 = sphi 0, %s138
      %s142 = sphi 0, %s141
      %s158 = sphi 0, %s142
    $region4: #{tpu_custom_call.1} parent=1 // loop_header_branch
      %21 = sbr.rel (%p19) target = $region8
    $region5: #{tpu_custom_call.1} parent=1 // loop_body
      %s23 = ssub.s32 %s18, 1
      %s24 = ssub.s32 %s18, 2
      %s25 = sadd.s32 %s18, 1
      %s26 = ssub.s32 %s18, %s25
      %p27 = scmp.eq.s32.totalorder %s26, 0
      %s29 = sadd.s32 %s28, 1
      %s30 = scalar_select %p27, %s28, %s29
      %p33 = pneg %p27
      %p34 = scmp.eq.s32.totalorder %s18, 1
      %p35 = por %p33, %p34
      %p36 = scmp.ne.s32.totalorder %s28, %s31
      %p37 = scmp.eq.s32.totalorder %s18, 0
      %p38 = por %p36, %p37
      %p39 = scmp.ne.s32.totalorder %s28, %s31
      %p40 = scmp.eq.s32.totalorder %s23, 1
      %p41 = por %p39, %p40
      %p42 = scmp.ne.s32.totalorder %s31, %s32
      %p43 = scmp.eq.s32.totalorder %s23, 0
      %p44 = por %p42, %p43
      %p45 = scmp.ne.s32.totalorder %s31, %s32
      %p46 = scmp.eq.s32.totalorder %s24, 1
      %p47 = por %p45, %p46
      %p49 = scmp.ne.s32.totalorder %s32, %s48
      %p50 = scmp.eq.s32.totalorder %s24, 0
      %p51 = por %p49, %p50
      %s53 = sadd.s32 %s52, 1
      %p56 = scmp.eq.s32.totalorder %s18, 1
      %p57 = scmp.ne.s32.totalorder %s52, %s54
      %p58 = scmp.eq.s32.totalorder %s18, 0
      %p59 = por %p57, %p58
      %p60 = scmp.ne.s32.totalorder %s52, %s54
      %p61 = scmp.eq.s32.totalorder %s23, 1
      %p62 = por %p60, %p61
      %p63 = scmp.ne.s32.totalorder %s54, %s55
      %p64 = scmp.eq.s32.totalorder %s23, 0
      %p65 = por %p63, %p64
      %p66 = scmp.ne.s32.totalorder %s54, %s55
      %p67 = scmp.eq.s32.totalorder %s24, 1
      %p68 = por %p66, %p67
      %p70 = scmp.ne.s32.totalorder %s55, %s69
      %p71 = scmp.eq.s32.totalorder %s24, 0
      %p72 = por %p70, %p71
      %s74 = sadd.s32 %s73, 1
      %p77 = scmp.eq.s32.totalorder %s18, 1
      %p78 = scmp.ne.s32.totalorder %s73, %s75
      %p79 = scmp.eq.s32.totalorder %s18, 0
      %p80 = por %p78, %p79
      %p81 = scmp.ne.s32.totalorder %s73, %s75
      %p82 = scmp.eq.s32.totalorder %s23, 1
      %p83 = por %p81, %p82
      %p84 = scmp.ne.s32.totalorder %s75, %s76
      %p85 = scmp.eq.s32.totalorder %s23, 0
      %p86 = por %p84, %p85
      %p87 = scmp.ne.s32.totalorder %s75, %s76
      %p88 = scmp.eq.s32.totalorder %s24, 1
      %p89 = por %p87, %p88
      %p91 = scmp.ne.s32.totalorder %s76, %s90
      %p92 = scmp.eq.s32.totalorder %s24, 0
      %p93 = por %p91, %p92
      %s95 = sadd.s32 %s94, 1
      %p98 = scmp.eq.s32.totalorder %s18, 1
      %p99 = scmp.ne.s32.totalorder %s94, %s96
      %p100 = scmp.eq.s32.totalorder %s18, 0
      %p101 = por %p99, %p100
      %p102 = scmp.ne.s32.totalorder %s94, %s96
      %p103 = scmp.eq.s32.totalorder %s23, 1
      %p104 = por %p102, %p103
      %p105 = scmp.ne.s32.totalorder %s96, %s97
      %p106 = scmp.eq.s32.totalorder %s23, 0
      %p107 = por %p105, %p106
      %p108 = scmp.ne.s32.totalorder %s96, %s97
      %p109 = scmp.eq.s32.totalorder %s24, 1
      %p110 = por %p108, %p109
      %p112 = scmp.ne.s32.totalorder %s97, %s111
      %p113 = scmp.eq.s32.totalorder %s24, 0
      %p114 = por %p112, %p113
      %s116 = sadd.s32 %s115, 1
      %p119 = scmp.eq.s32.totalorder %s18, 1
      %p120 = scmp.ne.s32.totalorder %s115, %s117
      %p121 = scmp.eq.s32.totalorder %s18, 0
      %p122 = por %p120, %p121
      %p123 = scmp.ne.s32.totalorder %s115, %s117
      %p124 = scmp.eq.s32.totalorder %s23, 1
      %p125 = por %p123, %p124
      %p126 = scmp.ne.s32.totalorder %s117, %s118
      %p127 = scmp.eq.s32.totalorder %s23, 0
      %p128 = por %p126, %p127
      %p129 = scmp.ne.s32.totalorder %s117, %s118
      %p130 = scmp.eq.s32.totalorder %s24, 1
      %p131 = por %p129, %p130
      %p133 = scmp.ne.s32.totalorder %s118, %s132
      %p134 = scmp.eq.s32.totalorder %s24, 0
      %p135 = por %p133, %p134
      %s136 = ssub.s32 %s18, %s25
      %p137 = scmp.eq.s32.totalorder %s136, 0
      %s139 = sadd.s32 %s138, 1
      %s140 = scalar_select %p137, %s138, %s139
      %p143 = pneg %p137
      %p144 = scmp.eq.s32.totalorder %s18, 1
      %p145 = por %p143, %p144
      %p146 = scmp.ne.s32.totalorder %s138, %s141
      %p147 = scmp.eq.s32.totalorder %s18, 0
      %p148 = por %p146, %p147
      %p149 = scmp.ne.s32.totalorder %s138, %s141
      %p150 = scmp.eq.s32.totalorder %s23, 1
      %p151 = por %p149, %p150
      %p152 = scmp.ne.s32.totalorder %s141, %s142
      %p153 = scmp.eq.s32.totalorder %s23, 0
      %p154 = por %p152, %p153
      %p155 = scmp.ne.s32.totalorder %s141, %s142
      %p156 = scmp.eq.s32.totalorder %s24, 1
      %p157 = por %p155, %p156
      %p159 = scmp.ne.s32.totalorder %s142, %s158
      %p160 = scmp.eq.s32.totalorder %s24, 0
      %p161 = por %p159, %p160
      %p162 = scmp.le.s32.totalorder 1, %s18
      %p163 = scmp.lt.s32.totalorder %s18, 3
      %p164 = pnand %p162, %p163
      %p165 = pneg %p164
      // Predicated region
      $region9: #{tpu_custom_call.1} parent=5 // pred_check
        _
      $region10: #{tpu_custom_call.1} parent=5 // pred_check_branch
        %167 = sbr.rel (%p164) target = $region12
      $region11: #{tpu_custom_call.1} parent=5 // pred_region
        %s168 = ssub.s32 %s18, 1
        // Predicated region
        $region13: #{tpu_custom_call.1} parent=11 // pred_check
          %p169 = pneg %p65
        $region14: #{tpu_custom_call.1} parent=11 // pred_check_branch
          %171 = sbr.rel (%p169) target = $region16
        $region15: #{tpu_custom_call.1} parent=11 // pred_region
          %s173 = ssub.s32 2048, 2048
          %174 = vsyncadd [#allocation6], %s173
          %s175 = sshll.u32 [#allocation5], 4
          %s176 = int_to_ptr.vmem [resolvable:$true] %s175
          %181 = dma.hbm_to_vmem [thread:$0]  %s1, 2048, %s176, [#allocation6], 128, 128, 8
        $region16: #{tpu_custom_call.1} parent=11 // pred_fallthru
          _
        // Predicated region
        $region17: #{tpu_custom_call.1} parent=11 // pred_check
          %p182 = pneg %p86
        $region18: #{tpu_custom_call.1} parent=11 // pred_check_branch
          %184 = sbr.rel (%p182) target = $region20
        $region19: #{tpu_custom_call.1} parent=11 // pred_region
          _
        $region20: #{tpu_custom_call.1} parent=11 // pred_fallthru
          _
        // Predicated region
        $region21: #{tpu_custom_call.1} parent=11 // pred_check
          %p185 = pneg %p107
        $region22: #{tpu_custom_call.1} parent=11 // pred_check_branch
          %187 = sbr.rel (%p185) target = $region24
        $region23: #{tpu_custom_call.1} parent=11 // pred_region
          %s189 = ssub.s32 2048, 2048
          %190 = vsyncadd [#allocation6], %s189
          %s191 = sshll.u32 [#allocation7], 4
          %s192 = int_to_ptr.vmem [resolvable:$true] %s191
          %197 = dma.hbm_to_vmem [thread:$0]  %s3, 2048, %s192, [#allocation6], 64, 64, 4
        $region24: #{tpu_custom_call.1} parent=11 // pred_fallthru
          _
        // Predicated region
        $region25: #{tpu_custom_call.1} parent=11 // pred_check
          %p198 = pneg %p128
        $region26: #{tpu_custom_call.1} parent=11 // pred_check_branch
          %200 = sbr.rel (%p198) target = $region28
        $region27: #{tpu_custom_call.1} parent=11 // pred_region
          _
        $region28: #{tpu_custom_call.1} parent=11 // pred_fallthru
          _
      $region12: #{tpu_custom_call.1} parent=5 // pred_fallthru
        _
      %p201 = scmp.lt.s32.totalorder %s18, 2
      // Predicated region
      $region29: #{tpu_custom_call.1} parent=5 // pred_check
        %p202 = pneg %p201
      $region30: #{tpu_custom_call.1} parent=5 // pred_check_branch
        %204 = sbr.rel (%p202) target = $region32
      $region31: #{tpu_custom_call.1} parent=5 // pred_region
        // Predicated region
        $region33: #{tpu_custom_call.1} parent=31 // pred_check
          %p205 = pneg %p38
        $region34: #{tpu_custom_call.1} parent=31 // pred_check_branch
          %207 = sbr.rel (%p205) target = $region36
        $region35: #{tpu_custom_call.1} parent=31 // pred_region
          %s208 = sand.u32 %s28, 1
          %s209 = scalar_lea.sflag [#allocation3], %s208
          %s210 = sand.u32 %s28, 1
          %s211 = smul.addr %s210, 32
          %s212 = scalar_lea.vmem [#allocation2], %s211
          %s213 = smul.u32 4, %s18
          %s214 = ssub.s32 5, %s213
          %p215 = scmp.lt.s32.totalorder %s214, 4
          %s216 = scalar_select %p215, %s214, 4
          %s217 = smul.u32 128, %s216
          %s219 = ssub.s32 512, %s217
          %220 = vsyncadd %s209, %s219
          %p221 = scmp.ne.s32.totalorder 0, %s217
          %s222 = smul.addr %s213, 128
          %s223 = scalar_lea.hbm %s0, %s222
          %s224 = smul.u32 8, %s216
          %s225 = sshll.u32 %s212, 4
          %s226 = int_to_ptr.vmem [resolvable:$true] %s225
          %s227 = sshll.u32 %s224, 4
          %231 = dma.hbm_to_vmem [thread:$0]  (%p221), %s223, %s227, %s226, %s209, 128, 128, 8
        $region36: #{tpu_custom_call.1} parent=31 // pred_fallthru
          _
      $region32: #{tpu_custom_call.1} parent=5 // pred_fallthru
        _
      %p232 = scmp.le.s32.totalorder 1, %s18
      %p233 = scmp.lt.s32.totalorder %s18, 3
      %p234 = pnand %p232, %p233
      %p235 = pneg %p234
      // Predicated region
      $region37: #{tpu_custom_call.1} parent=5 // pred_check
        _
      $region38: #{tpu_custom_call.1} parent=5 // pred_check_branch
        %237 = sbr.rel (%p234) target = $region40
      $region39: #{tpu_custom_call.1} parent=5 // pred_region
        %s238 = ssub.s32 %s18, 1
        %s239 = sand.u32 %s31, 1
        %s240 = scalar_lea.sflag [#allocation3], %s239
        %s241 = sand.u32 %s31, 1
        %s242 = smul.addr %s241, 32
        %s243 = scalar_lea.vmem [#allocation2], %s242
        // Predicated region
        $region41: #{tpu_custom_call.1} parent=39 // pred_check
          %p244 = pneg %p44
        $region42: #{tpu_custom_call.1} parent=39 // pred_check_branch
          %246 = sbr.rel (%p244) target = $region44
        $region43: #{tpu_custom_call.1} parent=39 // pred_region
          %247 = dma.done %s240, 512
        $region44: #{tpu_custom_call.1} parent=39 // pred_fallthru
          _
        // Predicated region
        $region45: #{tpu_custom_call.1} parent=39 // pred_check
          %p248 = pneg %p65
        $region46: #{tpu_custom_call.1} parent=39 // pred_check_branch
          %250 = sbr.rel (%p248) target = $region48
        $region47: #{tpu_custom_call.1} parent=39 // pred_region
          %251 = dma.done [#allocation6], 2048
        $region48: #{tpu_custom_call.1} parent=39 // pred_fallthru
          _
        // Predicated region
        $region49: #{tpu_custom_call.1} parent=39 // pred_check
          %p252 = pneg %p107
        $region50: #{tpu_custom_call.1} parent=39 // pred_check_branch
          %254 = sbr.rel (%p252) target = $region52
        $region51: #{tpu_custom_call.1} parent=39 // pred_region
          %255 = dma.done [#allocation6], 2048
        $region52: #{tpu_custom_call.1} parent=39 // pred_fallthru
          _
        %s256 = sand.u32 %s31, 1
        %s257 = scalar_lea.sflag [#allocation3], %s256
        %s258 = sand.u32 %s31, 1
        %s259 = smul.addr %s258, 32
        %s260 = scalar_lea.vmem [#allocation2], %s259
        %p261 = pneg %p44
        %p262 = pneg %p41
        %p263 = pneg %p65
        %p264 = pneg %p62
        %p265 = pneg %p86
        %p266 = pneg %p83
        %p267 = pneg %p107
        %p268 = pneg %p104
        %p269 = pneg %p128
        %p270 = pneg %p125
        %p271 = pneg %p154
        %p272 = pneg %p151
        %s273 = sand.u32 %s141, 1
        %s274 = scalar_lea.sflag [#allocation4], %s273
        %s275 = sand.u32 %s141, 1
        %s276 = smul.addr %s275, 32
        %s277 = scalar_lea.vmem [#allocation8], %s276
        %s278 = smul.u32 4, %s23
        %s279 = ssub.s32 5, %s278
        %p280 = scmp.lt.s32.totalorder %s279, 4
        %s281 = scalar_select %p280, %s279, 4
        %s282 = smul.u32 128, %s281
        %s283 = smul.u32 4, %s23
        %s284 = ssub.s32 5, %s283
        %p285 = scmp.lt.s32.totalorder %s284, 4
        %s286 = scalar_select %p285, %s284, 4
        %s287 = smul.u32 128, %s286
        %v290 = vld [vmem:[%s243] sm:$0xff]
        %v291 = vld [vmem:[%s243 + $0x8] sm:$0xff]
        %v292 = vld [vmem:[%s243 + $0x10] sm:$0xff]
        %v293 = vld [vmem:[%s243 + $0x18] sm:$0xff]
        %v294 = vpack.c.bf16 %v291, %v290
        %v295 = vpack.c.bf16 %v293, %v292
        %v296 = vld [vmem:[#allocation5] sm:$0xff]
        %v297 = vld [vmem:[#allocation5 + $0x8] sm:$0xff]
        %v298 = vld [vmem:[#allocation5 + $0x10] sm:$0xff]
        %v299 = vld [vmem:[#allocation5 + $0x18] sm:$0xff]
        %v300 = vld [vmem:[#allocation5 + $0x20] sm:$0xff]
        %v301 = vld [vmem:[#allocation5 + $0x28] sm:$0xff]
        %v302 = vld [vmem:[#allocation5 + $0x30] sm:$0xff]
        %v303 = vld [vmem:[#allocation5 + $0x38] sm:$0xff]
        %v304 = vld [vmem:[#allocation5 + $0x40] sm:$0xff]
        %v305 = vld [vmem:[#allocation5 + $0x48] sm:$0xff]
        %v306 = vld [vmem:[#allocation5 + $0x50] sm:$0xff]
        %v307 = vld [vmem:[#allocation5 + $0x58] sm:$0xff]
        %v308 = vld [vmem:[#allocation5 + $0x60] sm:$0xff]
        %v309 = vld [vmem:[#allocation5 + $0x68] sm:$0xff]
        %v310 = vld [vmem:[#allocation5 + $0x70] sm:$0xff]
        %v311 = vld [vmem:[#allocation5 + $0x78] sm:$0xff]
        %v312 = vld [vmem:[%s2] sm:$0x3]
        %v314 = vlaneseq
        %v315 = vshrl.u32 %v314, 7
        %v316 = vsub.s32 0, %v315
        %v317 = vrot.slane %v312, %v316
        %v318 = vlaneseq
        %v319 = vshrl.u32 %v318, 7
        %v320 = vsub.s32 1, %v319
        %v321 = vrot.slane %v312, %v320
        %v340 = vunpack.c.l.b16 %v296
        %v341 = vunpack.c.h.b16 %v296
        %v342 = vunpack.c.l.b16 %v297
        %v343 = vunpack.c.h.b16 %v297
        %v344 = vunpack.c.l.b16 %v298
        %v345 = vunpack.c.h.b16 %v298
        %v346 = vunpack.c.l.b16 %v299
        %v347 = vunpack.c.h.b16 %v299
        %v348 = vunpack.c.l.b16 %v300
        %v349 = vunpack.c.h.b16 %v300
        %v350 = vunpack.c.l.b16 %v301
        %v351 = vunpack.c.h.b16 %v301
        %v352 = vunpack.c.l.b16 %v302
        %v353 = vunpack.c.h.b16 %v302
        %v354 = vunpack.c.l.b16 %v303
        %v355 = vunpack.c.h.b16 %v303
        %v356 = vunpack.c.l.b16 %v304
        %v357 = vunpack.c.h.b16 %v304
        %v358 = vunpack.c.l.b16 %v305
        %v359 = vunpack.c.h.b16 %v305
        %v360 = vunpack.c.l.b16 %v306
        %v361 = vunpack.c.h.b16 %v306
        %v362 = vunpack.c.l.b16 %v307
        %v363 = vunpack.c.h.b16 %v307
        %v364 = vunpack.c.l.b16 %v308
        %v365 = vunpack.c.h.b16 %v308
        %v366 = vunpack.c.l.b16 %v309
        %v367 = vunpack.c.h.b16 %v309
        %v368 = vunpack.c.l.b16 %v310
        %v369 = vunpack.c.h.b16 %v310
        %v370 = vunpack.c.l.b16 %v311
        %v371 = vunpack.c.h.b16 %v311
        %v372 = vpack.c.b16 %v342, %v340
        %v373 = vpack.c.b16 %v343, %v341
        %v374 = vpack.c.b16 %v346, %v344
        %v375 = vpack.c.b16 %v347, %v345
        %v376 = vpack.c.b16 %v350, %v348
        %v377 = vpack.c.b16 %v351, %v349
        %v378 = vpack.c.b16 %v354, %v352
        %v379 = vpack.c.b16 %v355, %v353
        %v380 = vpack.c.b16 %v358, %v356
        %v381 = vpack.c.b16 %v359, %v357
        %v382 = vpack.c.b16 %v362, %v360
        %v383 = vpack.c.b16 %v363, %v361
        %v384 = vpack.c.b16 %v366, %v364
        %v385 = vpack.c.b16 %v367, %v365
        %v386 = vpack.c.b16 %v370, %v368
        %v387 = vpack.c.b16 %v371, %v369
        %404 = vmatprep.subr.bf16.mxu0 %v387
        %405 = vmatpush1.bf16.msra.mxu0 %v386
        %406 = vmatprep.subr.bf16.mxu0 %v385
        %407 = vmatpush1.bf16.msra.mxu0 %v384
        %408 = vmatprep.subr.bf16.mxu0 %v383
        %409 = vmatpush1.bf16.msra.mxu0 %v382
        %410 = vmatprep.subr.bf16.mxu0 %v381
        %411 = vmatpush1.bf16.msra.mxu0 %v380
        %412 = vmatprep.subr.bf16.mxu0 %v379
        %413 = vmatpush1.bf16.msra.mxu0 %v378
        %414 = vmatprep.subr.bf16.mxu0 %v377
        %415 = vmatpush1.bf16.msra.mxu0 %v376
        %416 = vmatprep.subr.bf16.mxu0 %v375
        %417 = vmatpush1.bf16.msra.mxu0 %v374
        %418 = vmatprep.subr.bf16.mxu0 %v373
        %419 = vmatpush1.bf16.msra.mxu0 %v372
        %420 = vmatprep.subr.bf16.mxu0 0
        %421 = vmatpush2.bf16.msra.mxu0 0
        %422 = vmatprep.subr.bf16.mxu0 0
        %423 = vmatpush2.bf16.msra.mxu0 0
        %424 = vmatprep.subr.bf16.mxu0 0
        %425 = vmatpush2.bf16.msra.mxu0 0
        %426 = vmatprep.subr.bf16.mxu0 0
        %427 = vmatpush2.bf16.msra.mxu0 0
        %428 = vmatprep.subr.bf16.mxu0 0
        %429 = vmatpush2.bf16.msra.mxu0 0
        %430 = vmatprep.subr.bf16.mxu0 0
        %431 = vmatpush2.bf16.msra.mxu0 0
        %432 = vmatprep.subr.bf16.mxu0 0
        %433 = vmatpush2.bf16.msra.mxu0 0
        %434 = vmatprep.subr.bf16.mxu0 0
        %435 = vmatpush2.bf16.msra.mxu0 0
        %436 = vmatprep.mubr.bf16.mxu0 0
        %437 = vmatmul.mubr.bf16.gmra.mxu0 %v294
        %v438 = vpop.f32.mrf.mxu0
        %v439 = vadd.f32 %v317, %v438
        %v440 = vpop.f32.mrf.mxu0
        %v441 = vadd.f32 %v321, %v440
        %v442 = vpop.f32.mrf.mxu0
        %v443 = vadd.f32 %v317, %v442
        %v444 = vpop.f32.mrf.mxu0
        %v445 = vadd.f32 %v321, %v444
        %446 = vmatprep.mubr.bf16.mxu0 0
        %447 = vmatmul.mubr.bf16.gmra.mxu0 %v295
        %v448 = vpop.f32.mrf.mxu0
        %v449 = vadd.f32 %v317, %v448
        %v450 = vpop.f32.mrf.mxu0
        %v451 = vadd.f32 %v321, %v450
        %v452 = vpop.f32.mrf.mxu0
        %v453 = vadd.f32 %v317, %v452
        %v454 = vpop.f32.mrf.mxu0
        %v455 = vadd.f32 %v321, %v454
        %456 = vdwg.mxu0
        %v457 = vpack.c.bf16 %v443, %v439
        %v458 = vpack.c.bf16 %v445, %v441
        %v459 = vpack.c.bf16 %v453, %v449
        %v460 = vpack.c.bf16 %v455, %v451
        %vm461 = vcmp.gt.bf16.partialorder %v457, 0
        %vm462 = vcmp.gt.bf16.partialorder %v458, 0
        %vm463 = vcmp.gt.bf16.partialorder %v459, 0
        %vm464 = vcmp.gt.bf16.partialorder %v460, 0
        %v465 = vmul.bf16 %v457, 1009007652
        %v466 = vmul.bf16 %v458, 1009007652
        %v467 = vmul.bf16 %v459, 1009007652
        %v468 = vmul.bf16 %v460, 1009007652
        %v469 = vsel %vm461, %v457, %v465
        %v470 = vsel %vm462, %v458, %v466
        %v471 = vsel %vm463, %v459, %v467
        %v472 = vsel %vm464, %v460, %v468
        %v473 = vld [vmem:[#allocation7] sm:$0xf]
        %v474 = vld [vmem:[#allocation7 + $0x4] sm:$0xf]
        %v475 = vld [vmem:[#allocation7 + $0x8] sm:$0xf]
        %v476 = vld [vmem:[#allocation7 + $0xc] sm:$0xf]
        %v477 = vld [vmem:[#allocation7 + $0x10] sm:$0xf]
        %v478 = vld [vmem:[#allocation7 + $0x14] sm:$0xf]
        %v479 = vld [vmem:[#allocation7 + $0x18] sm:$0xf]
        %v480 = vld [vmem:[#allocation7 + $0x1c] sm:$0xf]
        %v481 = vld [vmem:[#allocation7 + $0x20] sm:$0xf]
        %v482 = vld [vmem:[#allocation7 + $0x24] sm:$0xf]
        %v483 = vld [vmem:[#allocation7 + $0x28] sm:$0xf]
        %v484 = vld [vmem:[#allocation7 + $0x2c] sm:$0xf]
        %v485 = vld [vmem:[#allocation7 + $0x30] sm:$0xf]
        %v486 = vld [vmem:[#allocation7 + $0x34] sm:$0xf]
        %v487 = vld [vmem:[#allocation7 + $0x38] sm:$0xf]
        %v488 = vld [vmem:[#allocation7 + $0x3c] sm:$0xf]
        %v489 = vld [vmem:[#allocation7 + $0x40] sm:$0xf]
        %v490 = vld [vmem:[#allocation7 + $0x44] sm:$0xf]
        %v491 = vld [vmem:[#allocation7 + $0x48] sm:$0xf]
        %v492 = vld [vmem:[#allocation7 + $0x4c] sm:$0xf]
        %v493 = vld [vmem:[#allocation7 + $0x50] sm:$0xf]
        %v494 = vld [vmem:[#allocation7 + $0x54] sm:$0xf]
        %v495 = vld [vmem:[#allocation7 + $0x58] sm:$0xf]
        %v496 = vld [vmem:[#allocation7 + $0x5c] sm:$0xf]
        %v497 = vld [vmem:[#allocation7 + $0x60] sm:$0xf]
        %v498 = vld [vmem:[#allocation7 + $0x64] sm:$0xf]
        %v499 = vld [vmem:[#allocation7 + $0x68] sm:$0xf]
        %v500 = vld [vmem:[#allocation7 + $0x6c] sm:$0xf]
        %v501 = vld [vmem:[#allocation7 + $0x70] sm:$0xf]
        %v502 = vld [vmem:[#allocation7 + $0x74] sm:$0xf]
        %v503 = vld [vmem:[#allocation7 + $0x78] sm:$0xf]
        %v504 = vld [vmem:[#allocation7 + $0x7c] sm:$0xf]
        %v505 = vld [vmem:[%s4] sm:$0x1]
        %v507 = vlaneseq
        %v508 = vshrl.u32 %v507, 7
        %v509 = vsub.s32 0, %v508
        %v510 = vrot.slane %v505, %v509
        %v544 = vunpack.c.l.b16 %v473
        %v545 = vunpack.c.l.b16 %v474
        %v546 = vunpack.c.l.b16 %v475
        %v547 = vunpack.c.l.b16 %v476
        %v548 = vunpack.c.l.b16 %v477
        %v549 = vunpack.c.l.b16 %v478
        %v550 = vunpack.c.l.b16 %v479
        %v551 = vunpack.c.l.b16 %v480
        %v552 = vunpack.c.l.b16 %v481
        %v553 = vunpack.c.l.b16 %v482
        %v554 = vunpack.c.l.b16 %v483
        %v555 = vunpack.c.l.b16 %v484
        %v556 = vunpack.c.l.b16 %v485
        %v557 = vunpack.c.l.b16 %v486
        %v558 = vunpack.c.l.b16 %v487
        %v559 = vunpack.c.l.b16 %v488
        %v560 = vunpack.c.l.b16 %v489
        %v561 = vunpack.c.l.b16 %v490
        %v562 = vunpack.c.l.b16 %v491
        %v563 = vunpack.c.l.b16 %v492
        %v564 = vunpack.c.l.b16 %v493
        %v565 = vunpack.c.l.b16 %v494
        %v566 = vunpack.c.l.b16 %v495
        %v567 = vunpack.c.l.b16 %v496
        %v568 = vunpack.c.l.b16 %v497
        %v569 = vunpack.c.l.b16 %v498
        %v570 = vunpack.c.l.b16 %v499
        %v571 = vunpack.c.l.b16 %v500
        %v572 = vunpack.c.l.b16 %v501
        %v573 = vunpack.c.l.b16 %v502
        %v574 = vunpack.c.l.b16 %v503
        %v575 = vunpack.c.l.b16 %v504
        %v576 = vpack.c.b16 %v545, %v544
        %v577 = vpack.c.b16 %v547, %v546
        %v578 = vpack.c.b16 %v549, %v548
        %v579 = vpack.c.b16 %v551, %v550
        %v580 = vpack.c.b16 %v553, %v552
        %v581 = vpack.c.b16 %v555, %v554
        %v582 = vpack.c.b16 %v557, %v556
        %v583 = vpack.c.b16 %v559, %v558
        %v584 = vpack.c.b16 %v561, %v560
        %v585 = vpack.c.b16 %v563, %v562
        %v586 = vpack.c.b16 %v565, %v564
        %v587 = vpack.c.b16 %v567, %v566
        %v588 = vpack.c.b16 %v569, %v568
        %v589 = vpack.c.b16 %v571, %v570
        %v590 = vpack.c.b16 %v573, %v572
        %v591 = vpack.c.b16 %v575, %v574
        %608 = vmatprep.subr.bf16.mxu0 0
        %609 = vmatpush1.bf16.msra.mxu0 %v583
        %610 = vmatprep.subr.bf16.mxu0 0
        %611 = vmatpush1.bf16.msra.mxu0 %v582
        %612 = vmatprep.subr.bf16.mxu0 0
        %613 = vmatpush1.bf16.msra.mxu0 %v581
        %614 = vmatprep.subr.bf16.mxu0 0
        %615 = vmatpush1.bf16.msra.mxu0 %v580
        %616 = vmatprep.subr.bf16.mxu0 0
        %617 = vmatpush1.bf16.msra.mxu0 %v579
        %618 = vmatprep.subr.bf16.mxu0 0
        %619 = vmatpush1.bf16.msra.mxu0 %v578
        %620 = vmatprep.subr.bf16.mxu0 0
        %621 = vmatpush1.bf16.msra.mxu0 %v577
        %622 = vmatprep.subr.bf16.mxu0 0
        %623 = vmatpush1.bf16.msra.mxu0 %v576
        %624 = vmatprep.subr.bf16.mxu0 0
        %625 = vmatpush2.bf16.msra.mxu0 %v591
        %626 = vmatprep.subr.bf16.mxu0 0
        %627 = vmatpush2.bf16.msra.mxu0 %v590
        %628 = vmatprep.subr.bf16.mxu0 0
        %629 = vmatpush2.bf16.msra.mxu0 %v589
        %630 = vmatprep.subr.bf16.mxu0 0
        %631 = vmatpush2.bf16.msra.mxu0 %v588
        %632 = vmatprep.subr.bf16.mxu0 0
        %633 = vmatpush2.bf16.msra.mxu0 %v587
        %634 = vmatprep.subr.bf16.mxu0 0
        %635 = vmatpush2.bf16.msra.mxu0 %v586
        %636 = vmatprep.subr.bf16.mxu0 0
        %637 = vmatpush2.bf16.msra.mxu0 %v585
        %638 = vmatprep.subr.bf16.mxu0 0
        %639 = vmatpush2.bf16.msra.mxu0 %v584
        %640 = vmatprep.mubr.bf16.mxu0 %v470
        %641 = vmatmul.mubr.bf16.gmra.mxu0 %v469
        %v642 = vpop.f32.mrf.mxu0
        %v643 = vadd.f32 %v510, %v642
        %v644 = vpop.f32.mrf.mxu0
        %v645 = vpop.f32.mrf.mxu0
        %v646 = vadd.f32 %v510, %v645
        %v647 = vpop.f32.mrf.mxu0
        %648 = vmatprep.mubr.bf16.mxu0 %v472
        %649 = vmatmul.mubr.bf16.gmra.mxu0 %v471
        %v650 = vpop.f32.mrf.mxu0
        %v651 = vadd.f32 %v510, %v650
        %v652 = vpop.f32.mrf.mxu0
        %v653 = vpop.f32.mrf.mxu0
        %v654 = vadd.f32 %v510, %v653
        %v655 = vpop.f32.mrf.mxu0
        %656 = vdwg.mxu0
        %vm657 = vcmp.gt.f32.partialorder %v643, 20.0
        %vm658 = vcmp.gt.f32.partialorder %v646, 20.0
        %vm659 = vcmp.gt.f32.partialorder %v651, 20.0
        %vm660 = vcmp.gt.f32.partialorder %v654, 20.0
        %v661 = vmin.f32 %v643, 20.0
        %v662 = vmin.f32 %v646, 20.0
        %v663 = vmin.f32 %v651, 20.0
        %v664 = vmin.f32 %v654, 20.0
        %v665 = vmul.f32 %v661, 1.442695
        %v666 = vpow.pop %v665
        %v667 = vmul.f32 %v662, 1.442695
        %v668 = vpow.pop %v667
        %v669 = vmul.f32 %v663, 1.442695
        %v670 = vpow.pop %v669
        %v671 = vmul.f32 %v664, 1.442695
        %v672 = vpow.pop %v671
        %v673 = vadd.f32 %v666, 1.0
        %v674 = vlog2.pop %v673
        %v675 = vmul.f32 %v674, 0.6931472
        %v676 = vmul.f32 -0.5, %v666
        %v677 = vadd.f32 %v676, 1.0
        %v678 = vmul.f32 %v677, %v666
        %v679 = vand.u32 2147483647, %v666
        %vm680 = vcmp.lt.f32.partialorder %v679, 0.0004427343
        %v681 = vsel %vm680, %v678, %v675
        %v682 = vadd.f32 %v668, 1.0
        %v683 = vlog2.pop %v682
        %v684 = vmul.f32 %v683, 0.6931472
        %v685 = vmul.f32 -0.5, %v668
        %v686 = vadd.f32 %v685, 1.0
        %v687 = vmul.f32 %v686, %v668
        %v688 = vand.u32 2147483647, %v668
        %vm689 = vcmp.lt.f32.partialorder %v688, 0.0004427343
        %v690 = vsel %vm689, %v687, %v684
        %v691 = vadd.f32 %v670, 1.0
        %v692 = vlog2.pop %v691
        %v693 = vmul.f32 %v692, 0.6931472
        %v694 = vmul.f32 -0.5, %v670
        %v695 = vadd.f32 %v694, 1.0
        %v696 = vmul.f32 %v695, %v670
        %v697 = vand.u32 2147483647, %v670
        %vm698 = vcmp.lt.f32.partialorder %v697, 0.0004427343
        %v699 = vsel %vm698, %v696, %v693
        %v700 = vadd.f32 %v672, 1.0
        %v701 = vlog2.pop %v700
        %v702 = vmul.f32 %v701, 0.6931472
        %v703 = vmul.f32 -0.5, %v672
        %v704 = vadd.f32 %v703, 1.0
        %v705 = vmul.f32 %v704, %v672
        %v706 = vand.u32 2147483647, %v672
        %vm707 = vcmp.lt.f32.partialorder %v706, 0.0004427343
        %v708 = vsel %vm707, %v705, %v702
        %v709 = vsel %vm657, %v643, %v681
        %v710 = vsel %vm658, %v646, %v690
        %v711 = vsel %vm659, %v651, %v699
        %v712 = vsel %vm660, %v654, %v708
        %713 = vst [vmem:[%s277] sm:$0xff] %v709
        %714 = vst [vmem:[%s277 + $0x8] sm:$0xff] %v710
        %715 = vst [vmem:[%s277 + $0x10] sm:$0xff] %v711
        %716 = vst [vmem:[%s277 + $0x18] sm:$0xff] %v712
        %s717 = sand.u32 %s141, 1
        %s718 = scalar_lea.sflag [#allocation4], %s717
        %s719 = sand.u32 %s141, 1
        %s720 = smul.addr %s719, 32
        %s721 = scalar_lea.vmem [#allocation8], %s720
        // Predicated region
        $region53: #{tpu_custom_call.1} parent=39 // pred_check
          %p722 = pneg %p151
        $region54: #{tpu_custom_call.1} parent=39 // pred_check_branch
          %724 = sbr.rel (%p722) target = $region56
        $region55: #{tpu_custom_call.1} parent=39 // pred_region
          %s725 = smul.u32 4, %s23
          %s726 = ssub.s32 5, %s725
          %p727 = scmp.lt.s32.totalorder %s726, 4
          %s728 = scalar_select %p727, %s726, 4
          %s729 = smul.u32 128, %s728
          %s731 = ssub.s32 512, %s729
          %732 = vsyncadd %s718, %s731
          %p733 = scmp.ne.s32.totalorder 0, %s729
          %s734 = smul.addr %s725, 128
          %s735 = scalar_lea.hbm %s5, %s734
          %s736 = smul.u32 8, %s728
          %s737 = sshll.u32 %s721, 4
          %s738 = int_to_ptr.vmem [resolvable:$true] %s737
          %s739 = sshll.u32 %s736, 4
          %743 = dma.vmem_to_hbm [thread:$0]  (%p733), %s738, %s739, %s735, %s718, 128, 128, 8
        $region56: #{tpu_custom_call.1} parent=39 // pred_fallthru
          _
      $region40: #{tpu_custom_call.1} parent=5 // pred_fallthru
        _
      %p744 = scmp.le.s32.totalorder 2, %s18
      // Predicated region
      $region57: #{tpu_custom_call.1} parent=5 // pred_check
        %p745 = pneg %p744
      $region58: #{tpu_custom_call.1} parent=5 // pred_check_branch
        %747 = sbr.rel (%p745) target = $region60
      $region59: #{tpu_custom_call.1} parent=5 // pred_region
        %s748 = ssub.s32 %s18, 2
        // Predicated region
        $region61: #{tpu_custom_call.1} parent=59 // pred_check
          %p749 = pneg %p157
        $region62: #{tpu_custom_call.1} parent=59 // pred_check_branch
          %751 = sbr.rel (%p749) target = $region64
        $region63: #{tpu_custom_call.1} parent=59 // pred_region
          %s752 = sand.u32 %s142, 1
          %s753 = scalar_lea.sflag [#allocation4], %s752
          %s754 = sand.u32 %s142, 1
          %s755 = smul.addr %s754, 32
          %s756 = scalar_lea.vmem [#allocation8], %s755
          %757 = dma.done %s753, 512
        $region64: #{tpu_custom_call.1} parent=59 // pred_fallthru
          _
      $region60: #{tpu_custom_call.1} parent=5 // pred_fallthru
        _
    $region6: #{tpu_custom_call.1} parent=1 // loop_footer
      %s22 = sadd.s32 1, %s18
    $region7: #{tpu_custom_call.1} parent=1 // loop_footer_branch
      %17 = sbr.rel target = $region3
    $region8: #{tpu_custom_call.1} parent=1 // loop_exit
      _
    %758 = vsyncpa [#allocation3], 1
    %s759 = scalar_lea.sflag [#allocation3], 1
    %760 = vsyncpa %s759, 1
    %761 = vsyncpa [#allocation6], 1
    %762 = vsyncpa [#allocation4], 1
    %s763 = scalar_lea.sflag [#allocation4], 1
    %764 = vsyncpa %s763, 1

</llo_original>
